<compile_context>
chip_gen: v7x
topology: tpu7x:2x2x1
jax: 0.10.0
libtpu: 0.0.40
codegen_flags: <defaults>
</compile_context>

<pallas_src>
import functools

import jax
import jax.numpy as jnp
from jax.experimental import pallas as pl
from jax.experimental.pallas import tpu as pltpu

LANE = 128
MAX_TILE_ROWS = 2048  # 1 MiB per f32 input block; ~6 MiB double-buffered streams


def _round_up(x, m):
    return ((x + m - 1) // m) * m


def _sublane_tile(dtype):
    # Native sublane packing: f32 -> 8, bf16/f16 -> 16, int8/bool -> 32.
    return max(8, 32 // jnp.dtype(dtype).itemsize)


def _pointwise_loss(gamma, cw, logit_ref, target_ref):
    """Per-element focal loss for the current (block_rows, LANE) tile."""
    x = logit_ref[...].astype(jnp.float32)
    t = target_ref[...].astype(jnp.float32)

    # torch gathers by target.long(); for targets in [0, 2) that is `t >= 1`.
    pos = t >= 1.0

    # sigmoid(-x) == 1 - sigmoid(x): fold the class select in front of the
    # transcendental so each element costs exactly one sigmoid + one log (EUP).
    p_t = jax.nn.sigmoid(jnp.where(pos, x, -x))
    # NOTE: 1 - 1e-8 rounds to exactly 1.0 in float32, so the upper clip is a
    # no-op -- this matches PyTorch's float32 behaviour.
    p_t = jnp.clip(p_t, 1e-8, 1.0 - 1e-8)

    one_m = 1.0 - p_t
    g = float(gamma)
    if g == 0.0:
        focal = jnp.ones_like(one_m)
    elif g.is_integer() and 1.0 <= g <= 8.0:
        # small integer gamma: repeated multiply (VPU) instead of pow (EUP exp+log)
        focal = one_m
        for _ in range(int(g) - 1):
            focal = focal * one_m
    else:
        focal = jnp.power(one_m, jnp.float32(g))

    nll = -jnp.log(p_t)
    cw0, cw1 = cw
    if cw0 == 1.0 and cw1 == 1.0:
        # default weights: skip the gather and the extra multiply entirely
        return focal * nll
    w = jnp.where(pos, jnp.float32(cw1), jnp.float32(cw0))
    return w * (focal * nll)


def _focal_elementwise_kernel(gamma, cw, logit_ref, target_ref, loss_ref):
    # size_average=False path: write the full per-element loss tile.
    # Out-of-bounds rows of a ragged last block are clipped on writeback,
    # and the (optional) lane pad is sliced off in the wrapper.
    loss_ref[...] = _pointwise_loss(gamma, cw, logit_ref, target_ref)


def _focal_partials_kernel(gamma, cw, n, block_rows, needs_mask,
                           logit_ref, target_ref, psum_ref):
    # size_average=True path: emit one (8, LANE) partial-sum tile per block.
    loss = _pointwise_loss(gamma, cw, logit_ref, target_ref)

    def _reduce(x):
        # Tile-aligned reshape (block_rows % 8 == 0, lane dim untouched) so no
        # relayout copy is expected; just block_rows/8 VPU adds per lane.
        return jnp.sum(x.reshape(block_rows // 8, 8, LANE), axis=0)

    if not needs_mask:
        # No lane pad and block_rows divides rows: never any invalid data.
        psum_ref[...] = _reduce(loss)
    else:
        i = pl.program_id(0)
        last = pl.num_programs(0) - 1

        @pl.when(i != last)
        def _():
            # Interior blocks: unmasked reduce, zero extra VALU work.
            psum_ref[...] = _reduce(loss)

        @pl.when(i == last)
        def _():
            # Only the last block can contain the lane pad / row overhang.
            row = (jax.lax.broadcasted_iota(jnp.int32, (block_rows, LANE), 0)
                   + i * block_rows)
            lane = jax.lax.broadcasted_iota(jnp.int32, (block_rows, LANE), 1)
            full_rows, rem = divmod(n, LANE)  # static Python ints
            valid = (row < full_rows) | ((row == full_rows) & (lane < rem))
            psum_ref[...] = _reduce(jnp.where(valid, loss, 0.0))


def binary_focal_loss_2d(logit, target, class_weight=None, gamma=2,
                         size_average=True):
    """JAX/Pallas equivalent of BinaryFocalLoss2d.forward."""
    if class_weight is None:
        class_weight = (1.0, 1.0)
    # class_weight is a static Python sequence (as in the torch usage) and is
    # baked into the kernel -- no SMEM prefetch stream needed.
    # TODO(synk): add a scalar-prefetch path if traced weight arrays are ever needed.
    cw = (float(class_weight[0]), float(class_weight[1]))

    n = int(logit.size)
    flat_logit = jnp.ravel(logit)        # keep original dtypes; upcast in-kernel
    flat_target = jnp.ravel(target)

    rem = n % LANE
    if rem:
        # Only needed when n is not a multiple of 128 (pads < 128 elements).
        pad = LANE - rem
        flat_logit = jnp.pad(flat_logit, (0, pad))
        flat_target = jnp.pad(flat_target, (0, pad))

    rows = flat_logit.shape[0] // LANE
    logit2 = flat_logit.reshape(rows, LANE)
    target2 = flat_target.reshape(rows, LANE)

    # Sublane alignment of the streamed dtypes (f32 -> 8, bf16 -> 16, int8/bool -> 32).
    row_align = max(_sublane_tile(logit2.dtype), _sublane_tile(target2.dtype), 8)

    # Block sizing: big lane-dense tiles to amortize the ~0.35us/step grid
    # overhead, but target >= 2 grid blocks so both v7x TensorCores get work.
    half_rows = -(-rows // 2)
    block_rows = min(MAX_TILE_ROWS, max(row_align, _round_up(half_rows, row_align)))
    num_blocks = pl.cdiv(rows, block_rows)

    # Explicit scoped-VMEM budget: double-buffered input (+ output) streams,
    # plus headroom for f32 intermediates.  Clamped to stay v5e/v7x friendly.
    stream_bytes = logit2.dtype.itemsize + target2.dtype.itemsize
    if not size_average:
        stream_bytes += 4  # f32 loss writeback
    vmem_limit = 2 * block_rows * LANE * stream_bytes + (8 << 20)
    vmem_limit = int(min(48 << 20, max(16 << 20, vmem_limit)))

    in_specs = [
        pl.BlockSpec((block_rows, LANE), lambda i: (i, 0)),
        pl.BlockSpec((block_rows, LANE), lambda i: (i, 0)),
    ]
    cparams = pltpu.CompilerParams(
        dimension_semantics=("parallel",),
        vmem_limit_bytes=vmem_limit,
    )

    if size_average:
        needs_mask = (rem != 0) or (rows % block_rows != 0)
        kernel = functools.partial(_focal_partials_kernel, float(gamma), cw, n,
                                   block_rows, needs_mask)
        partials = pl.pallas_call(
            kernel,
            out_shape=jax.ShapeDtypeStruct((num_blocks * 8, LANE), jnp.float32),
            grid=(num_blocks,),
            in_specs=in_specs,
            out_specs=pl.BlockSpec((8, LANE), lambda i: (i, 0)),
            compiler_params=cparams,
        )(logit2, target2)
        # Final reduce on a tiny array in the wrapper (tree-reduced, no drift).
        return jnp.sum(partials) / jnp.float32(n)

    kernel = functools.partial(_focal_elementwise_kernel, float(gamma), cw)
    loss2 = pl.pallas_call(
        kernel,
        out_shape=jax.ShapeDtypeStruct((rows, LANE), jnp.float32),
        grid=(num_blocks,),
        in_specs=in_specs,
        out_specs=pl.BlockSpec((block_rows, LANE), lambda i: (i, 0)),
        compiler_params=cparams,
    )(logit2, target2)
    # matches torch: batch_loss of shape (N, 1)
    return loss2.reshape(-1)[:n].reshape(-1, 1)


def _reference(logit, target, class_weight=None, gamma=2, size_average=True):
    """Literal JAX translation of the PyTorch forward (f32)."""
    if class_weight is None:
        class_weight = [1.0, 1.0]
    cw = jnp.asarray(class_weight, jnp.float32)
    tl = jnp.ravel(target).astype(jnp.int32)          # torch: target.long()
    prob = jax.nn.sigmoid(jnp.ravel(logit).astype(jnp.float32))
    p_t = jnp.where(tl == 1, prob, 1.0 - prob)
    p_t = jnp.clip(p_t, 1e-8, 1.0 - 1e-8)
    w = cw[tl]
    loss = -w * jnp.power(1.0 - p_t, float(gamma)) * jnp.log(p_t)
    return loss.mean() if size_average else loss.reshape(-1, 1)


if __name__ == "__main__":
    key = jax.random.PRNGKey(0)
    k1, k2 = jax.random.split(key)

    # NCHW logits; binary target of the same shape.
    logit = jax.random.normal(k1, (2, 3, 16, 16), dtype=jnp.float32)
    target = jax.random.bernoulli(k2, 0.5, (2, 3, 16, 16)).astype(jnp.float32)

    # size_average=True -> scalar mean loss
    loss_mean = binary_focal_loss_2d(logit, target, class_weight=None, gamma=2)
    loss_mean = jax.block_until_ready(loss_mean)
    ref_mean = _reference(logit, target, gamma=2)
    assert jnp.allclose(loss_mean, ref_mean, rtol=1e-5, atol=1e-5), (
        loss_mean, ref_mean)

    # size_average=False -> per-element (N, 1) loss, non-default class weights
    loss_elem = binary_focal_loss_2d(logit, target, class_weight=[0.25, 0.75],
                                     gamma=2, size_average=False)
    loss_elem = jax.block_until_ready(loss_elem)
    ref_elem = _reference(logit, target, class_weight=[0.25, 0.75], gamma=2,
                          size_average=False)
    assert loss_elem.shape == (logit.size, 1)
    assert jnp.allclose(loss_elem, ref_elem, rtol=1e-5, atol=1e-5)

    # non-integer gamma exercises the jnp.power fallback path
    loss_g = binary_focal_loss_2d(logit, target, gamma=1.5)
    loss_g = jax.block_until_ready(loss_g)
    ref_g = _reference(logit, target, gamma=1.5)
    assert jnp.allclose(loss_g, ref_g, rtol=1e-5, atol=1e-5), (loss_g, ref_g)

    print("KERNEL_OK")
</pallas_src>

<mosaic_0001>
module attributes {stable_mosaic.version = 11 : i64} {
  func.func @_focal_partials_kernel(%arg0: i32, %arg1: memref<8x128xf32, #tpu.memory_space<vmem>>, %arg2: memref<8x128xf32, #tpu.memory_space<vmem>>, %arg3: memref<8x128xf32, #tpu.memory_space<vmem>>) attributes {dimension_semantics = [#tpu.dimension_semantics<parallel>], iteration_bounds = array<i64: 2>, scalar_prefetch = 0 : i64, scratch_operands = 0 : i64, tpu.core_type = #tpu.core_type<tc>, window_params = [{transform_indices = @transform_0, window_bounds = array<i64: 8, 128>}, {transform_indices = @transform_1, window_bounds = array<i64: 8, 128>}, {transform_indices = @transform_2, window_bounds = array<i64: 8, 128>}]} {
    %c0 = arith.constant 0 : index
    %c0_0 = arith.constant 0 : index
    %0 = vector.load %arg1[%c0, %c0_0] : memref<8x128xf32, #tpu.memory_space<vmem>>, vector<8x128xf32>
    %c0_1 = arith.constant 0 : index
    %c0_2 = arith.constant 0 : index
    %1 = vector.load %arg2[%c0_1, %c0_2] : memref<8x128xf32, #tpu.memory_space<vmem>>, vector<8x128xf32>
    %cst = arith.constant 1.000000e+00 : f32
    %2 = vector.broadcast %cst : f32 to vector<8x128xf32>
    %3 = arith.cmpf oge, %1, %2 : vector<8x128xf32>
    %cst_3 = arith.constant 0.000000e+00 : f32
    %4 = vector.broadcast %cst_3 : f32 to vector<8x128xf32>
    %5 = arith.subf %4, %0 : vector<8x128xf32>
    %6 = arith.select %3, %0, %5 : vector<8x128xi1>, vector<8x128xf32>
    %7 = arith.negf %6 : vector<8x128xf32>
    %8 = math.exp %7 : vector<8x128xf32>
    %cst_4 = arith.constant 1.000000e+00 : f32
    %9 = vector.broadcast %cst_4 : f32 to vector<8x128xf32>
    %10 = arith.addf %9, %8 : vector<8x128xf32>
    %11 = arith.divf %9, %10 : vector<8x128xf32>
    %cst_5 = arith.constant 9.99999993E-9 : f32
    %cst_6 = arith.constant 1.000000e+00 : f32
    %12 = vector.broadcast %cst_5 : f32 to vector<8x128xf32>
    %13 = arith.maximumf %12, %11 : vector<8x128xf32>
    %14 = vector.broadcast %cst_6 : f32 to vector<8x128xf32>
    %15 = arith.minimumf %14, %13 : vector<8x128xf32>
    %cst_7 = arith.constant 1.000000e+00 : f32
    %16 = vector.broadcast %cst_7 : f32 to vector<8x128xf32>
    %17 = arith.subf %16, %15 : vector<8x128xf32>
    %18 = arith.mulf %17, %17 : vector<8x128xf32>
    %19 = math.log %15 : vector<8x128xf32>
    %cst_8 = arith.constant 0.000000e+00 : f32
    %20 = vector.broadcast %cst_8 : f32 to vector<8x128xf32>
    %21 = arith.subf %20, %19 : vector<8x128xf32>
    %22 = arith.mulf %18, %21 : vector<8x128xf32>
    %c1_i32 = arith.constant 1 : i32
    %23 = arith.cmpi ne, %arg0, %c1_i32 : i32
    %24 = arith.extui %23 : i1 to i32
    %c0_i32 = arith.constant 0 : i32
    %25 = arith.cmpi ne, %24, %c0_i32 : i32
    scf.if %25 {
      %29 = vector.shape_cast %22 : vector<8x128xf32> to vector<1x8x128xf32>
      %cst_11 = arith.constant dense<0.000000e+00> : vector<8x128xf32>
      %30 = vector.multi_reduction <add>, %29, %cst_11 [0] : vector<1x8x128xf32> to vector<8x128xf32>
      %c0_12 = arith.constant 0 : index
      %c0_13 = arith.constant 0 : index
      %31 = vector.load %arg3[%c0_12, %c0_13] : memref<8x128xf32, #tpu.memory_space<vmem>>, vector<8x128xf32>
      tpu.vector_store %arg3[%c0_12, %c0_13], %30 {strides = array<i32>} : memref<8x128xf32, #tpu.memory_space<vmem>>, vector<8x128xf32>,
    } else {
    }
    %c1_i32_9 = arith.constant 1 : i32
    %26 = arith.cmpi eq, %arg0, %c1_i32_9 : i32
    %27 = arith.extui %26 : i1 to i32
    %c0_i32_10 = arith.constant 0 : i32
    %28 = arith.cmpi ne, %27, %c0_i32_10 : i32
    scf.if %28 {
      %29 = tpu.iota {dimensions = array<i32: 0>} : vector<8x128xi32>
      %c8_i32 = arith.constant 8 : i32
      %30 = arith.muli %arg0, %c8_i32 : i32
      %31 = vector.broadcast %30 : i32 to vector<8x128xi32>
      %32 = arith.addi %29, %31 : vector<8x128xi32>
      %33 = tpu.iota {dimensions = array<i32: 1>} : vector<8x128xi32>
      %c12_i32 = arith.constant 12 : i32
      %34 = vector.broadcast %c12_i32 : i32 to vector<8x128xi32>
      %35 = arith.cmpi slt, %32, %34 : vector<8x128xi32>
      %c12_i32_11 = arith.constant 12 : i32
      %36 = vector.broadcast %c12_i32_11 : i32 to vector<8x128xi32>
      %37 = arith.cmpi eq, %32, %36 : vector<8x128xi32>
      %c0_i32_12 = arith.constant 0 : i32
      %38 = vector.broadcast %c0_i32_12 : i32 to vector<8x128xi32>
      %39 = arith.cmpi slt, %33, %38 : vector<8x128xi32>
      %40 = arith.andi %37, %39 : vector<8x128xi1>
      %41 = arith.ori %35, %40 : vector<8x128xi1>
      %cst_13 = arith.constant 0.000000e+00 : f32
      %42 = vector.broadcast %cst_13 : f32 to vector<8x128xf32>
      %43 = arith.select %41, %22, %42 : vector<8x128xi1>, vector<8x128xf32>
      %44 = vector.shape_cast %43 : vector<8x128xf32> to vector<1x8x128xf32>
      %cst_14 = arith.constant dense<0.000000e+00> : vector<8x128xf32>
      %45 = vector.multi_reduction <add>, %44, %cst_14 [0] : vector<1x8x128xf32> to vector<8x128xf32>
      %c0_15 = arith.constant 0 : index
      %c0_16 = arith.constant 0 : index
      %46 = vector.load %arg3[%c0_15, %c0_16] : memref<8x128xf32, #tpu.memory_space<vmem>>, vector<8x128xf32>
      tpu.vector_store %arg3[%c0_15, %c0_16], %45 {strides = array<i32>} : memref<8x128xf32, #tpu.memory_space<vmem>>, vector<8x128xf32>,
    } else {
    }
    return
  }
  func.func @transform_0(%arg0: i32) -> (i32, i32) {
    %c0_i32 = arith.constant 0 : i32
    %c0_i32_0 = arith.constant 0 : i32
    return %arg0, %c0_i32 : i32, i32
  }
  func.func @transform_1(%arg0: i32) -> (i32, i32) {
    %c0_i32 = arith.constant 0 : i32
    %c0_i32_0 = arith.constant 0 : i32
    return %arg0, %c0_i32 : i32, i32
  }
  func.func @transform_2(%arg0: i32) -> (i32, i32) {
    %c0_i32 = arith.constant 0 : i32
    %c0_i32_0 = arith.constant 0 : i32
    return %arg0, %c0_i32 : i32, i32
  }
}

</mosaic_0001>

<llo_original>
// kernel: tpu_custom_call.1
$region0: #{tpu_custom_call.1}
  #allocation0 [shape = 'u32[]', space=smem, size = 0x4, offset = 0x4, fixed_abs, tag = 'smem constant byte address 0x4 - core index']
  #allocation1 [shape = 'u32[144,128]{1,0:T(1,128)}', space=vmem, size = 0x12000, scoped, tag = 'internal scratch']
  %s0 = inlined_call_operand.hbm [shape: f32[12,128], index: 0, kind: input, shape index: {}]
  %s1 = inlined_call_operand.hbm [shape: f32[12,128], index: 1, kind: input, shape index: {}]
  %s2 = inlined_call_operand.hbm [shape: f32[16,128], index: 2, kind: output, shape index: {}]
  %s3 = sld [smem:[#allocation0]]
  $region57: #{tpu_custom_call.1} parent=0
    _
  %s5 = ssub.s32 1, %s3
  %s6 = scalar_select 0, %s5, %s3
  $region1: #{tpu_custom_call.1} parent=0
    #allocation2 [shape = 'u8[8192]{0}', space=vmem, size = 0x2000, scoped, tag = 'input window, operand 0']
    #allocation3 [shape = 's32[2]{0}', space=sflag, size = 0x8, scoped, tag = 'scoped memory for tpu_custom_call.1']
    #allocation4 [shape = 's32[2]{0}', space=sflag, size = 0x8, scoped, tag = 'scoped memory for tpu_custom_call.1']
    #allocation5 [shape = 'u8[8192]{0}', space=vmem, size = 0x2000, scoped, tag = 'input window, operand 1']
    #allocation6 [shape = 's32[2]{0}', space=sflag, size = 0x8, scoped, tag = 'scoped memory for tpu_custom_call.1']
    #allocation7 [shape = 'u8[8192]{0}', space=vmem, size = 0x2000, scoped, tag = 'output window, operand 0']
    %7 = vsyncpa [#allocation3], 0
    %s8 = scalar_lea.sflag [#allocation3], 1
    %9 = vsyncpa %s8, 0
    %10 = vsyncpa [#allocation6], 0
    %s11 = scalar_lea.sflag [#allocation6], 1
    %12 = vsyncpa %s11, 0
    %13 = vsyncpa [#allocation4], 0
    %s14 = scalar_lea.sflag [#allocation4], 1
    %15 = vsyncpa %s14, 0
    loop: start=0, step=1, limit=4
    $region2: #{tpu_custom_call.1} parent=1 // loop_pre_header
      _
    $region3: #{tpu_custom_call.1} parent=1 // loop_header
      %s17 = sphi 0, %s21
      %p18 = scmp.ge.s32.totalorder %s17, 4
      %s27 = sphi 0, %s29
      %s30 = sphi 0, %s27
      %s31 = sphi 0, %s30
      %s47 = sphi 0, %s31
      %s53 = sphi 0, %s55
      %s56 = sphi 0, %s53
      %s57 = sphi 0, %s56
      %s73 = sphi 0, %s57
      %s79 = sphi 0, %s81
      %s82 = sphi 0, %s79
      %s83 = sphi 0, %s82
      %s99 = sphi 0, %s83
    $region4: #{tpu_custom_call.1} parent=1 // loop_header_branch
      %20 = sbr.rel (%p18) target = $region8
    $region5: #{tpu_custom_call.1} parent=1 // loop_body
      %s22 = ssub.s32 %s17, 1
      %s23 = ssub.s32 %s17, 2
      %s24 = sadd.s32 %s17, 1
      %s25 = ssub.s32 %s17, %s24
      %p26 = scmp.eq.s32.totalorder %s25, 0
      %s28 = sadd.s32 %s27, 1
      %s29 = scalar_select %p26, %s27, %s28
      %p32 = pneg %p26
      %p33 = scmp.eq.s32.totalorder %s17, 1
      %p34 = por %p32, %p33
      %p35 = scmp.ne.s32.totalorder %s27, %s30
      %p36 = scmp.eq.s32.totalorder %s17, 0
      %p37 = por %p35, %p36
      %p38 = scmp.ne.s32.totalorder %s27, %s30
      %p39 = scmp.eq.s32.totalorder %s22, 1
      %p40 = por %p38, %p39
      %p41 = scmp.ne.s32.totalorder %s30, %s31
      %p42 = scmp.eq.s32.totalorder %s22, 0
      %p43 = por %p41, %p42
      %p44 = scmp.ne.s32.totalorder %s30, %s31
      %p45 = scmp.eq.s32.totalorder %s23, 1
      %p46 = por %p44, %p45
      %p48 = scmp.ne.s32.totalorder %s31, %s47
      %p49 = scmp.eq.s32.totalorder %s23, 0
      %p50 = por %p48, %p49
      %s51 = ssub.s32 %s17, %s24
      %p52 = scmp.eq.s32.totalorder %s51, 0
      %s54 = sadd.s32 %s53, 1
      %s55 = scalar_select %p52, %s53, %s54
      %p58 = pneg %p52
      %p59 = scmp.eq.s32.totalorder %s17, 1
      %p60 = por %p58, %p59
      %p61 = scmp.ne.s32.totalorder %s53, %s56
      %p62 = scmp.eq.s32.totalorder %s17, 0
      %p63 = por %p61, %p62
      %p64 = scmp.ne.s32.totalorder %s53, %s56
      %p65 = scmp.eq.s32.totalorder %s22, 1
      %p66 = por %p64, %p65
      %p67 = scmp.ne.s32.totalorder %s56, %s57
      %p68 = scmp.eq.s32.totalorder %s22, 0
      %p69 = por %p67, %p68
      %p70 = scmp.ne.s32.totalorder %s56, %s57
      %p71 = scmp.eq.s32.totalorder %s23, 1
      %p72 = por %p70, %p71
      %p74 = scmp.ne.s32.totalorder %s57, %s73
      %p75 = scmp.eq.s32.totalorder %s23, 0
      %p76 = por %p74, %p75
      %s77 = ssub.s32 %s17, %s24
      %p78 = scmp.eq.s32.totalorder %s77, 0
      %s80 = sadd.s32 %s79, 1
      %s81 = scalar_select %p78, %s79, %s80
      %p84 = pneg %p78
      %p85 = scmp.eq.s32.totalorder %s17, 1
      %p86 = por %p84, %p85
      %p87 = scmp.ne.s32.totalorder %s79, %s82
      %p88 = scmp.eq.s32.totalorder %s17, 0
      %p89 = por %p87, %p88
      %p90 = scmp.ne.s32.totalorder %s79, %s82
      %p91 = scmp.eq.s32.totalorder %s22, 1
      %p92 = por %p90, %p91
      %p93 = scmp.ne.s32.totalorder %s82, %s83
      %p94 = scmp.eq.s32.totalorder %s22, 0
      %p95 = por %p93, %p94
      %p96 = scmp.ne.s32.totalorder %s82, %s83
      %p97 = scmp.eq.s32.totalorder %s23, 1
      %p98 = por %p96, %p97
      %p100 = scmp.ne.s32.totalorder %s83, %s99
      %p101 = scmp.eq.s32.totalorder %s23, 0
      %p102 = por %p100, %p101
      %p103 = scmp.le.s32.totalorder 1, %s17
      %p104 = scmp.lt.s32.totalorder %s17, 3
      %p105 = pnand %p103, %p104
      %p106 = pneg %p105
      // Predicated region
      $region9: #{tpu_custom_call.1} parent=5 // pred_check
        _
      $region10: #{tpu_custom_call.1} parent=5 // pred_check_branch
        %108 = sbr.rel (%p105) target = $region12
      $region11: #{tpu_custom_call.1} parent=5 // pred_region
        %s109 = ssub.s32 %s17, 1
      $region12: #{tpu_custom_call.1} parent=5 // pred_fallthru
        _
      %p110 = scmp.lt.s32.totalorder %s17, 2
      // Predicated region
      $region13: #{tpu_custom_call.1} parent=5 // pred_check
        %p111 = pneg %p110
      $region14: #{tpu_custom_call.1} parent=5 // pred_check_branch
        %113 = sbr.rel (%p111) target = $region16
      $region15: #{tpu_custom_call.1} parent=5 // pred_region
        // Predicated region
        $region17: #{tpu_custom_call.1} parent=15 // pred_check
          %p114 = pneg %p37
        $region18: #{tpu_custom_call.1} parent=15 // pred_check_branch
          %116 = sbr.rel (%p114) target = $region20
        $region19: #{tpu_custom_call.1} parent=15 // pred_region
          %s117 = sand.u32 %s27, 1
          %s118 = scalar_lea.sflag [#allocation3], %s117
          %s119 = sand.u32 %s27, 1
          %s120 = smul.addr %s119, 8
          %s121 = scalar_lea.vmem [#allocation2], %s120
          %s123 = ssub.s32 128, 128
          %124 = vsyncadd %s118, %s123
          %s125 = smul.addr %s17, 128
          %s126 = scalar_lea.hbm %s0, %s125
          %s128 = sshll.u32 %s121, 4
          %s129 = int_to_ptr.vmem [resolvable:$true] %s128
          %131 = dma.hbm_to_vmem [thread:$0]  %s126, 128, %s129, %s118
        $region20: #{tpu_custom_call.1} parent=15 // pred_fallthru
          _
        // Predicated region
        $region21: #{tpu_custom_call.1} parent=15 // pred_check
          %p132 = pneg %p63
        $region22: #{tpu_custom_call.1} parent=15 // pred_check_branch
          %134 = sbr.rel (%p132) target = $region24
        $region23: #{tpu_custom_call.1} parent=15 // pred_region
          %s135 = sand.u32 %s53, 1
          %s136 = scalar_lea.sflag [#allocation6], %s135
          %s137 = sand.u32 %s53, 1
          %s138 = smul.addr %s137, 8
          %s139 = scalar_lea.vmem [#allocation5], %s138
          %s141 = ssub.s32 128, 128
          %142 = vsyncadd %s136, %s141
          %s143 = smul.addr %s17, 128
          %s144 = scalar_lea.hbm %s1, %s143
          %s146 = sshll.u32 %s139, 4
          %s147 = int_to_ptr.vmem [resolvable:$true] %s146
          %149 = dma.hbm_to_vmem [thread:$0]  %s144, 128, %s147, %s136
        $region24: #{tpu_custom_call.1} parent=15 // pred_fallthru
          _
      $region16: #{tpu_custom_call.1} parent=5 // pred_fallthru
        _
      %p150 = scmp.le.s32.totalorder 1, %s17
      %p151 = scmp.lt.s32.totalorder %s17, 3
      %p152 = pnand %p150, %p151
      %p153 = pneg %p152
      // Predicated region
      $region25: #{tpu_custom_call.1} parent=5 // pred_check
        _
      $region26: #{tpu_custom_call.1} parent=5 // pred_check_branch
        %155 = sbr.rel (%p152) target = $region28
      $region27: #{tpu_custom_call.1} parent=5 // pred_region
        %s156 = ssub.s32 %s17, 1
        %s157 = sand.u32 %s30, 1
        %s158 = scalar_lea.sflag [#allocation3], %s157
        %s159 = sand.u32 %s30, 1
        %s160 = smul.addr %s159, 8
        %s161 = scalar_lea.vmem [#allocation2], %s160
        // Predicated region
        $region29: #{tpu_custom_call.1} parent=27 // pred_check
          %p162 = pneg %p43
        $region30: #{tpu_custom_call.1} parent=27 // pred_check_branch
          %164 = sbr.rel (%p162) target = $region32
        $region31: #{tpu_custom_call.1} parent=27 // pred_region
          %165 = dma.done %s158, 128
        $region32: #{tpu_custom_call.1} parent=27 // pred_fallthru
          _
        %s166 = sand.u32 %s56, 1
        %s167 = scalar_lea.sflag [#allocation6], %s166
        %s168 = sand.u32 %s56, 1
        %s169 = smul.addr %s168, 8
        %s170 = scalar_lea.vmem [#allocation5], %s169
        // Predicated region
        $region33: #{tpu_custom_call.1} parent=27 // pred_check
          %p171 = pneg %p69
        $region34: #{tpu_custom_call.1} parent=27 // pred_check_branch
          %173 = sbr.rel (%p171) target = $region36
        $region35: #{tpu_custom_call.1} parent=27 // pred_region
          %174 = dma.done %s167, 128
        $region36: #{tpu_custom_call.1} parent=27 // pred_fallthru
          _
        %s175 = sand.u32 %s30, 1
        %s176 = scalar_lea.sflag [#allocation3], %s175
        %s177 = sand.u32 %s30, 1
        %s178 = smul.addr %s177, 8
        %s179 = scalar_lea.vmem [#allocation2], %s178
        %p180 = pneg %p43
        %p181 = pneg %p40
        %s182 = sand.u32 %s56, 1
        %s183 = scalar_lea.sflag [#allocation6], %s182
        %s184 = sand.u32 %s56, 1
        %s185 = smul.addr %s184, 8
        %s186 = scalar_lea.vmem [#allocation5], %s185
        %p187 = pneg %p69
        %p188 = pneg %p66
        %p189 = pneg %p95
        %p190 = pneg %p92
        %s191 = sand.u32 %s82, 1
        %s192 = scalar_lea.sflag [#allocation4], %s191
        %s193 = sand.u32 %s82, 1
        %s194 = smul.addr %s193, 8
        %s195 = scalar_lea.vmem [#allocation7], %s194
        %v196 = vld [vmem:[%s161] sm:$0xff]
        %v197 = vld [vmem:[%s170] sm:$0xff]
        %vm198 = vcmp.ge.f32.partialorder %v197, 1.0
        %v199 = vsub.f32 0.0, %v196
        %v200 = vsel %vm198, %v196, %v199
        %v201 = vxor.u32 %v200, 2147483648
        %v202 = vmul.f32 %v201, 1.442695
        %v203 = vpow.pop %v202
        %v204 = vadd.f32 %v203, 1.0
        %v205 = vrcp.pop %v204
        %v206 = vmul.f32 1.0, %v205
        %v207 = vmax.f32 %v206, 1e-08
        %v208 = vmin.f32 %v207, 1.0
        %v209 = vsub.f32 1.0, %v208
        %v210 = vmul.f32 %v209, %v209
        %v211 = vlog2.pop %v208
        %v212 = vmul.f32 %v211, 0.6931472
        %v213 = vsub.f32 0.0, %v212
        %v214 = vmul.f32 %v210, %v213
        %p215 = scmp.ne.s32.totalorder %s22, 1
        // Predicated region
        $region37: #{tpu_custom_call.1} parent=27 // pred_check
          %p216 = pneg %p215
        $region38: #{tpu_custom_call.1} parent=27 // pred_check_branch
          %218 = sbr.rel (%p216) target = $region40
        $region39: #{tpu_custom_call.1} parent=27 // pred_region
          %v219 = vadd.f32 %v214, 0.0
          %220 = vst [vmem:[%s195] sm:$0xff] %v219
        $region40: #{tpu_custom_call.1} parent=27 // pred_fallthru
          _
        %p221 = scmp.eq.s32.totalorder %s22, 1
        // Predicated region
        $region41: #{tpu_custom_call.1} parent=27 // pred_check
          %p222 = pneg %p221
        $region42: #{tpu_custom_call.1} parent=27 // pred_check_branch
          %224 = sbr.rel (%p222) target = $region44
        $region43: #{tpu_custom_call.1} parent=27 // pred_region
          %v225 = vlaneseq
          %v226 = vshrl.u32 %v225, 7
          %s227 = smul.u32 %s22, 8
          %v228 = vstv %s227
          %v229 = vadd.s32 %v226, %v228
          %v230 = vlaneseq
          %v231 = vand.u32 %v230, 127
          %vm232 = vcmp.lt.s32.totalorder %v229, 12
          %vm233 = vcmp.eq.s32.totalorder %v229, 12
          %vm234 = vcmp.lt.s32.totalorder %v231, 0
          %vm235 = vmand %vm233, %vm234
          %vm236 = vmor %vm232, %vm235
          %v237 = vsel %vm236, %v214, 0.0
          %v238 = vadd.f32 %v237, 0.0
          %239 = vst [vmem:[%s195] sm:$0xff] %v238
        $region44: #{tpu_custom_call.1} parent=27 // pred_fallthru
          _
        %s240 = sand.u32 %s82, 1
        %s241 = scalar_lea.sflag [#allocation4], %s240
        %s242 = sand.u32 %s82, 1
        %s243 = smul.addr %s242, 8
        %s244 = scalar_lea.vmem [#allocation7], %s243
        // Predicated region
        $region45: #{tpu_custom_call.1} parent=27 // pred_check
          %p245 = pneg %p92
        $region46: #{tpu_custom_call.1} parent=27 // pred_check_branch
          %247 = sbr.rel (%p245) target = $region48
        $region47: #{tpu_custom_call.1} parent=27 // pred_region
          %s249 = ssub.s32 128, 128
          %250 = vsyncadd %s241, %s249
          %s251 = smul.addr %s22, 128
          %s252 = scalar_lea.hbm %s2, %s251
          %s254 = sshll.u32 %s244, 4
          %s255 = int_to_ptr.vmem [resolvable:$true] %s254
          %257 = dma.vmem_to_hbm [thread:$0]  %s255, 128, %s252, %s241
        $region48: #{tpu_custom_call.1} parent=27 // pred_fallthru
          _
      $region28: #{tpu_custom_call.1} parent=5 // pred_fallthru
        _
      %p258 = scmp.le.s32.totalorder 2, %s17
      // Predicated region
      $region49: #{tpu_custom_call.1} parent=5 // pred_check
        %p259 = pneg %p258
      $region50: #{tpu_custom_call.1} parent=5 // pred_check_branch
        %261 = sbr.rel (%p259) target = $region52
      $region51: #{tpu_custom_call.1} parent=5 // pred_region
        %s262 = ssub.s32 %s17, 2
        // Predicated region
        $region53: #{tpu_custom_call.1} parent=51 // pred_check
          %p263 = pneg %p98
        $region54: #{tpu_custom_call.1} parent=51 // pred_check_branch
          %265 = sbr.rel (%p263) target = $region56
        $region55: #{tpu_custom_call.1} parent=51 // pred_region
          %s266 = sand.u32 %s83, 1
          %s267 = scalar_lea.sflag [#allocation4], %s266
          %s268 = sand.u32 %s83, 1
          %s269 = smul.addr %s268, 8
          %s270 = scalar_lea.vmem [#allocation7], %s269
          %271 = dma.done %s267, 128
        $region56: #{tpu_custom_call.1} parent=51 // pred_fallthru
          _
      $region52: #{tpu_custom_call.1} parent=5 // pred_fallthru
        _
    $region6: #{tpu_custom_call.1} parent=1 // loop_footer
      %s21 = sadd.s32 1, %s17
    $region7: #{tpu_custom_call.1} parent=1 // loop_footer_branch
      %16 = sbr.rel target = $region3
    $region8: #{tpu_custom_call.1} parent=1 // loop_exit
      _
    %272 = vsyncpa [#allocation3], 1
    %s273 = scalar_lea.sflag [#allocation3], 1
    %274 = vsyncpa %s273, 1
    %275 = vsyncpa [#allocation6], 1
    %s276 = scalar_lea.sflag [#allocation6], 1
    %277 = vsyncpa %s276, 1
    %278 = vsyncpa [#allocation4], 1
    %s279 = scalar_lea.sflag [#allocation4], 1
    %280 = vsyncpa %s279, 1

</llo_original>
